<compile_context>
chip_gen: v7x
topology: tpu7x:2x2x1
jax: 0.10.0
libtpu: 0.0.40
codegen_flags: <defaults>
</compile_context>

<pallas_src>
import functools

import jax
import jax.numpy as jnp
from jax.experimental import pallas as pl
from jax.experimental.pallas import tpu as pltpu


def _cdiv(a: int, b: int) -> int:
    return (a + b - 1) // b


def _round_up(x: int, m: int) -> int:
    return _cdiv(x, m) * m


def _vmem_capacity_bytes() -> int:
    """Physical VMEM per TensorCore (128 MiB v5e/v6e, 64 MiB v7x)."""
    try:
        return int(pltpu.get_tpu_info().vmem_capacity_bytes)
    except Exception:
        return 64 * 1024 * 1024  # conservative fallback (v7x-sized)


# ---------------------------------------------------------------------------
# Kernels
# ---------------------------------------------------------------------------

def _mlp_fused_kernel(x_ref, w1_ref, b1_ref, w2_ref, b2_ref, o_ref):
    """matmul -> bias -> ReLU -> matmul -> bias on one (tb, F) batch tile.

    Weights / biases are VMEM-resident across the whole batch grid; the hidden
    activation lives only in registers/VMEM and never touches HBM.
    """
    h = jnp.dot(x_ref[...], w1_ref[...], preferred_element_type=jnp.float32)
    h = jnp.maximum(h + b1_ref[...].astype(jnp.float32), 0.0)
    y = jnp.dot(h.astype(w2_ref.dtype), w2_ref[...],
                preferred_element_type=jnp.float32)
    o_ref[...] = (y + b2_ref[...].astype(jnp.float32)).astype(o_ref.dtype)


def _mlp_hidden_tiled_kernel(x_ref, w1_ref, b1_ref, w2_ref, b2_ref, o_ref,
                             acc_ref):
    """Same MLP, but the hidden dim is tiled over grid axis 1 (reduction).

    ReLU acts per hidden unit, so ReLU(x @ W1[:, chunk] + b1[chunk]) computed
    chunk-by-chunk and accumulated as chunk @ W2[chunk, :] into an f32 VMEM
    accumulator is exact.  Used when the weights do not fit in VMEM.
    """
    k = pl.program_id(1)

    @pl.when(k == 0)
    def _():
        acc_ref[...] = jnp.zeros_like(acc_ref)

    h = jnp.dot(x_ref[...], w1_ref[...], preferred_element_type=jnp.float32)
    h = jnp.maximum(h + b1_ref[...].astype(jnp.float32), 0.0)
    acc_ref[...] += jnp.dot(h.astype(w2_ref.dtype), w2_ref[...],
                            preferred_element_type=jnp.float32)

    @pl.when(k == pl.num_programs(1) - 1)
    def _():
        o_ref[...] = (acc_ref[...] + b2_ref[...].astype(jnp.float32)
                      ).astype(o_ref.dtype)


# ---------------------------------------------------------------------------
# Tile selection
# ---------------------------------------------------------------------------

def _pick_batch_tile_fused(b, f, h, o, itemsize, budget):
    # Pallas double-buffers every BlockSpec input, weights/biases included.
    resident = 2 * (f * h + h + h * o + o) * itemsize
    avail = budget - resident
    tb = min(1024, _round_up(b, 8))
    while tb > 8:
        work = 2 * tb * (f + o) * itemsize + tb * (h + o) * 4
        if work <= avail:
            break
        tb -= 8
    tb = max(tb, 8)
    # Give the 2nd TensorCore (v7x) something to do when the whole batch would
    # otherwise be a single grid step; near-free on single-core parts.
    if _cdiv(b, tb) == 1 and b > 8:
        tb = max(8, _round_up(_cdiv(b, 2), 8))
    return tb


def _pick_tiles_hidden(b, f, h, o, itemsize, budget, block_hidden):
    def work(tb_, th_):
        return (2 * (f * th_ + th_ + th_ * o + o) * itemsize
                + 2 * tb_ * (f + o) * itemsize + tb_ * (th_ + o) * 4)

    tb = min(512, _round_up(b, 8))
    if block_hidden is not None:
        th = max(128, _round_up(int(block_hidden), 128))
    else:
        th = min(2048, _round_up(h, 128))
        while th > 128 and work(tb, th) > budget:
            th -= 128
        th = max(th, 128)
    while tb > 8 and work(tb, th) > budget:
        tb -= 8
    tb = max(tb, 8)
    if _cdiv(b, tb) == 1 and b > 8:
        tb = max(8, _round_up(_cdiv(b, 2), 8))
    return tb, th


# ---------------------------------------------------------------------------
# Public API
# ---------------------------------------------------------------------------

def prepare_params(w1, b1, w2, b2):
    """One-time conversion of PyTorch nn.Linear params (out, in) to the
    (in, out) layout the kernel consumes.  Call once at model setup so the
    per-forward path carries no transpose / reshape traffic."""
    w1_t = jnp.asarray(w1).T                 # (n_feature, n_hidden)
    b1_r = jnp.asarray(b1).reshape(1, -1)    # (1, n_hidden)
    w2_t = jnp.asarray(w2).T                 # (n_hidden, n_output)
    b2_r = jnp.asarray(b2).reshape(1, -1)    # (1, n_output)
    return w1_t, b1_r, w2_t, b2_r


@functools.partial(
    jax.jit,
    static_argnames=("force_hidden_tiling", "block_hidden", "interpret"))
def net_forward(x, w1_t, b1_r, w2_t, b2_r, *, force_hidden_tiling=False,
                block_hidden=None, interpret=False):
    """Forward pass of `Net`.

    Args:
      x:     (B, n_feature)
      w1_t:  (n_feature, n_hidden)   -- from prepare_params
      b1_r:  (1, n_hidden)
      w2_t:  (n_hidden, n_output)
      b2_r:  (1, n_output)
    Returns:
      (B, n_output)
    """
    b, n_feature = x.shape
    n_hidden, n_output = w2_t.shape
    dtype = x.dtype
    itemsize = jnp.dtype(dtype).itemsize

    cap = _vmem_capacity_bytes()
    budget = int(cap * 0.70)        # working-set target for tile selection
    vmem_limit = int(cap * 0.85)    # scoped-VMEM limit handed to Mosaic

    # Does the fused (all-weights-resident) variant fit?  Account for the 2x
    # double-buffering of every input and a minimal 8-row batch tile.
    resident = 2 * (n_feature * n_hidden + n_hidden
                    + n_hidden * n_output + n_output) * itemsize
    min_fused = (resident + 2 * 8 * (n_feature + n_output) * itemsize
                 + 8 * (n_hidden + n_output) * 4)
    use_hidden_tiling = force_hidden_tiling or (min_fused > budget)

    if not use_hidden_tiling:
        tb = _pick_batch_tile_fused(b, n_feature, n_hidden, n_output,
                                    itemsize, budget)
        nb = _cdiv(b, tb)
        b_pad = nb * tb
        if b_pad != b:  # cheap batch-only pad for the ragged last tile
            x = jnp.pad(x, ((0, b_pad - b), (0, 0)))

        out = pl.pallas_call(
            _mlp_fused_kernel,
            out_shape=jax.ShapeDtypeStruct((b_pad, n_output), dtype),
            grid_spec=pltpu.PrefetchScalarGridSpec(
                num_scalar_prefetch=0,
                grid=(nb,),
                in_specs=[
                    # Batch-tiled activation (true feature width, no pad).
                    pl.BlockSpec((tb, n_feature), lambda i: (i, 0)),
                    # Weights / biases: VMEM-resident across all grid steps.
                    pl.BlockSpec((n_feature, n_hidden), lambda i: (0, 0)),
                    pl.BlockSpec((1, n_hidden), lambda i: (0, 0)),
                    pl.BlockSpec((n_hidden, n_output), lambda i: (0, 0)),
                    pl.BlockSpec((1, n_output), lambda i: (0, 0)),
                ],
                out_specs=pl.BlockSpec((tb, n_output), lambda i: (i, 0)),
            ),
            compiler_params=pltpu.CompilerParams(
                dimension_semantics=("parallel",),
                vmem_limit_bytes=vmem_limit),
            interpret=interpret,
        )(x, w1_t, b1_r, w2_t, b2_r)
    else:
        tb, th = _pick_tiles_hidden(b, n_feature, n_hidden, n_output,
                                    itemsize, budget, block_hidden)
        nb = _cdiv(b, tb)
        b_pad = nb * tb
        if b_pad != b:
            x = jnp.pad(x, ((0, b_pad - b), (0, 0)))

        h_pad = _round_up(n_hidden, th)
        if h_pad != n_hidden:
            # TODO(synk): for very large layers hoist this one-time hidden pad
            # into prepare_params so it is not repeated per forward call.
            ph = h_pad - n_hidden
            w1_t = jnp.pad(w1_t, ((0, 0), (0, ph)))
            b1_r = jnp.pad(b1_r, ((0, 0), (0, ph)))
            w2_t = jnp.pad(w2_t, ((0, ph), (0, 0)))
        nk = h_pad // th

        out = pl.pallas_call(
            _mlp_hidden_tiled_kernel,
            out_shape=jax.ShapeDtypeStruct((b_pad, n_output), dtype),
            grid_spec=pltpu.PrefetchScalarGridSpec(
                num_scalar_prefetch=0,
                grid=(nb, nk),
                in_specs=[
                    pl.BlockSpec((tb, n_feature), lambda i, k: (i, 0)),
                    pl.BlockSpec((n_feature, th), lambda i, k: (0, k)),
                    pl.BlockSpec((1, th), lambda i, k: (0, k)),
                    pl.BlockSpec((th, n_output), lambda i, k: (k, 0)),
                    pl.BlockSpec((1, n_output), lambda i, k: (0, 0)),
                ],
                out_specs=pl.BlockSpec((tb, n_output), lambda i, k: (i, 0)),
                scratch_shapes=[pltpu.VMEM((tb, n_output), jnp.float32)],
            ),
            compiler_params=pltpu.CompilerParams(
                dimension_semantics=("parallel", "arbitrary"),
                vmem_limit_bytes=vmem_limit),
            interpret=interpret,
        )(x, w1_t, b1_r, w2_t, b2_r)

    if b_pad != b:
        out = out[:b]
    return out


def _reference(x, w1, b1, w2, b2):
    h = jnp.maximum(x @ w1.T + b1, 0.0)
    return h @ w2.T + b2


if __name__ == "__main__":
    key = jax.random.PRNGKey(0)

    # --- Path 1: fused kernel (weights VMEM-resident): Net(4, 32, 1), B=16.
    n_feature, n_hidden, n_output, batch = 4, 32, 1, 16
    kx, kw1, kb1, kw2, kb2 = jax.random.split(key, 5)
    x = jax.random.normal(kx, (batch, n_feature), dtype=jnp.float32)
    w1 = jax.random.normal(kw1, (n_hidden, n_feature), dtype=jnp.float32) * 0.1
    b1 = jax.random.normal(kb1, (n_hidden,), dtype=jnp.float32) * 0.1
    w2 = jax.random.normal(kw2, (n_output, n_hidden), dtype=jnp.float32) * 0.1
    b2 = jax.random.normal(kb2, (n_output,), dtype=jnp.float32) * 0.1

    params = prepare_params(w1, b1, w2, b2)   # one-time layout prep
    y = jax.block_until_ready(net_forward(x, *params))
    y_ref = _reference(x, w1, b1, w2, b2)
    assert y.shape == (batch, n_output), y.shape
    assert jnp.allclose(y, y_ref, atol=1e-5, rtol=1e-5), (
        "fused path mismatch vs reference:\n%s\n%s" % (y, y_ref))

    # --- Path 2: hidden-tiled fallback (for layers too big for VMEM),
    #     exercised here at a small size by forcing the path and tile.
    n_hidden2 = 256
    kw1b, kb1b, kw2b, kb2b = jax.random.split(kw2, 4)
    w1b = jax.random.normal(kw1b, (n_hidden2, n_feature), jnp.float32) * 0.1
    b1b = jax.random.normal(kb1b, (n_hidden2,), jnp.float32) * 0.1
    w2b = jax.random.normal(kw2b, (n_output, n_hidden2), jnp.float32) * 0.1
    b2b = jax.random.normal(kb2b, (n_output,), jnp.float32) * 0.1

    params2 = prepare_params(w1b, b1b, w2b, b2b)
    y2 = jax.block_until_ready(
        net_forward(x, *params2, force_hidden_tiling=True, block_hidden=128))
    y2_ref = _reference(x, w1b, b1b, w2b, b2b)
    assert y2.shape == (batch, n_output), y2.shape
    assert jnp.allclose(y2, y2_ref, atol=1e-4, rtol=1e-4), (
        "hidden-tiled path mismatch vs reference:\n%s\n%s" % (y2, y2_ref))

    print("KERNEL_OK")
</pallas_src>

<mosaic_0001>
module attributes {stable_mosaic.version = 11 : i64} {
  func.func @_mlp_fused_kernel(%arg0: i32, %arg1: memref<8x4xf32, #tpu.memory_space<vmem>>, %arg2: memref<4x32xf32, #tpu.memory_space<vmem>>, %arg3: memref<1x32xf32, #tpu.memory_space<vmem>>, %arg4: memref<32x1xf32, #tpu.memory_space<vmem>>, %arg5: memref<1x1xf32, #tpu.memory_space<vmem>>, %arg6: memref<8x1xf32, #tpu.memory_space<vmem>>) attributes {dimension_semantics = [#tpu.dimension_semantics<parallel>], iteration_bounds = array<i64: 2>, scalar_prefetch = 0 : i64, scratch_operands = 0 : i64, tpu.core_type = #tpu.core_type<tc>, window_params = [{transform_indices = @transform_0, window_bounds = array<i64: 8, 4>}, {pipeline_mode = #tpu.pipeline_mode<synchronous>, transform_indices = @transform_1, window_bounds = array<i64: 4, 32>}, {pipeline_mode = #tpu.pipeline_mode<synchronous>, transform_indices = @transform_2, window_bounds = array<i64: 1, 32>}, {pipeline_mode = #tpu.pipeline_mode<synchronous>, transform_indices = @transform_3, window_bounds = array<i64: 32, 1>}, {pipeline_mode = #tpu.pipeline_mode<synchronous>, transform_indices = @transform_4, window_bounds = array<i64: 1, 1>}, {transform_indices = @transform_5, window_bounds = array<i64: 8, 1>}]} {
    %c0 = arith.constant 0 : index
    %c0_0 = arith.constant 0 : index
    %0 = vector.load %arg1[%c0, %c0_0] : memref<8x4xf32, #tpu.memory_space<vmem>>, vector<8x4xf32>
    %c0_1 = arith.constant 0 : index
    %c0_2 = arith.constant 0 : index
    %1 = vector.load %arg2[%c0_1, %c0_2] : memref<4x32xf32, #tpu.memory_space<vmem>>, vector<4x32xf32>
    %cst = arith.constant dense<0.000000e+00> : vector<8x32xf32>
    %2 = tpu.matmul %0, %1, %cst {dimension_numbers = #tpu.dot_dimension_numbers<[1], [0], [0], [1], [0, 0, 1, 1], [], []>} : vector<8x4xf32>, vector<4x32xf32>, vector<8x32xf32> -> vector<8x32xf32>
    %c0_3 = arith.constant 0 : index
    %c0_4 = arith.constant 0 : index
    %3 = vector.load %arg3[%c0_3, %c0_4] : memref<1x32xf32, #tpu.memory_space<vmem>>, vector<1x32xf32>
    %4 = vector.broadcast %3 : vector<1x32xf32> to vector<8x32xf32>
    %5 = arith.addf %2, %4 : vector<8x32xf32>
    %cst_5 = arith.constant 0.000000e+00 : f32
    %6 = vector.broadcast %cst_5 : f32 to vector<8x32xf32>
    %7 = arith.maximumf %5, %6 : vector<8x32xf32>
    %c0_6 = arith.constant 0 : index
    %c0_7 = arith.constant 0 : index
    %8 = vector.load %arg4[%c0_6, %c0_7] : memref<32x1xf32, #tpu.memory_space<vmem>>, vector<32x1xf32>
    %cst_8 = arith.constant dense<0.000000e+00> : vector<8x1xf32>
    %9 = tpu.matmul %7, %8, %cst_8 {dimension_numbers = #tpu.dot_dimension_numbers<[1], [0], [0], [1], [0, 0, 1, 1], [], []>} : vector<8x32xf32>, vector<32x1xf32>, vector<8x1xf32> -> vector<8x1xf32>
    %c0_9 = arith.constant 0 : index
    %c0_10 = arith.constant 0 : index
    %10 = vector.load %arg5[%c0_9, %c0_10] : memref<1x1xf32, #tpu.memory_space<vmem>>, vector<1x1xf32>
    %11 = vector.broadcast %10 : vector<1x1xf32> to vector<8x1xf32>
    %12 = arith.addf %9, %11 : vector<8x1xf32>
    %c0_11 = arith.constant 0 : index
    %c0_12 = arith.constant 0 : index
    %13 = vector.load %arg6[%c0_11, %c0_12] : memref<8x1xf32, #tpu.memory_space<vmem>>, vector<8x1xf32>
    tpu.vector_store %arg6[%c0_11, %c0_12], %12 {strides = array<i32>} : memref<8x1xf32, #tpu.memory_space<vmem>>, vector<8x1xf32>,
    return
  }
  func.func @transform_0(%arg0: i32) -> (i32, i32) {
    %c0_i32 = arith.constant 0 : i32
    %c0_i32_0 = arith.constant 0 : i32
    return %arg0, %c0_i32 : i32, i32
  }
  func.func @transform_1(%arg0: i32) -> (i32, i32) {
    %c0_i32 = arith.constant 0 : i32
    %c0_i32_0 = arith.constant 0 : i32
    %c0_i32_1 = arith.constant 0 : i32
    return %c0_i32, %c0_i32_0 : i32, i32
  }
  func.func @transform_2(%arg0: i32) -> (i32, i32) {
    %c0_i32 = arith.constant 0 : i32
    %c0_i32_0 = arith.constant 0 : i32
    %c0_i32_1 = arith.constant 0 : i32
    return %c0_i32, %c0_i32_0 : i32, i32
  }
  func.func @transform_3(%arg0: i32) -> (i32, i32) {
    %c0_i32 = arith.constant 0 : i32
    %c0_i32_0 = arith.constant 0 : i32
    %c0_i32_1 = arith.constant 0 : i32
    return %c0_i32, %c0_i32_0 : i32, i32
  }
  func.func @transform_4(%arg0: i32) -> (i32, i32) {
    %c0_i32 = arith.constant 0 : i32
    %c0_i32_0 = arith.constant 0 : i32
    %c0_i32_1 = arith.constant 0 : i32
    return %c0_i32, %c0_i32_0 : i32, i32
  }
  func.func @transform_5(%arg0: i32) -> (i32, i32) {
    %c0_i32 = arith.constant 0 : i32
    %c0_i32_0 = arith.constant 0 : i32
    return %arg0, %c0_i32 : i32, i32
  }
}

</mosaic_0001>

<llo_original>
// kernel: net_forward.1
$region0: #{net_forward.1}
  #allocation0 [shape = 'u32[]', space=smem, size = 0x4, offset = 0x4, fixed_abs, tag = 'smem constant byte address 0x4 - core index']
  #allocation1 [shape = 'u32[144,128]{1,0:T(1,128)}', space=vmem, size = 0x12000, scoped, tag = 'internal scratch']
  #allocation2 [shape = 'f32[1,1]{1,0:T(1,128)S(1)}', space=vmem, size = 0x200, scoped, tag = 'scoped memory for net_forward.1']
  %s0 = inlined_call_operand.vmem [shape: f32[16,4], index: 0, kind: input, shape index: {}]
  %s1 = inlined_call_operand.vmem [shape: f32[4,32], index: 1, kind: input, shape index: {}]
  %s2 = inlined_call_operand.vmem [shape: f32[1,32], index: 2, kind: input, shape index: {}]
  %s3 = inlined_call_operand.vmem [shape: f32[32,1], index: 3, kind: input, shape index: {}]
  %s4 = inlined_call_operand.<no memory space> [shape: f32[1,1], index: 4, kind: input, shape index: {}]
  %s5 = inlined_call_operand.vmem [shape: f32[16,1], index: 5, kind: output, shape index: {}]
  %s6 = sld [smem:[#allocation0]]
  $region53: #{net_forward.1} parent=0
    _
  %s8 = ssub.s32 1, %s6
  %s9 = scalar_select 0, %s8, %s6
  %v10 = vstv %s4
  %11 = vst [vmem:[#allocation2] sm:$0x1] %v10
  loop: start=0, step=1, limit=4
  $region2: #{net_forward.1} parent=0 // loop_pre_header
    _
  $region3: #{net_forward.1} parent=0 // loop_header
    %s13 = sphi 0, %s17
    %p14 = scmp.ge.s32.totalorder %s13, 4
    %s23 = sphi 0, %s25
    %s26 = sphi 0, %s23
    %s27 = sphi 0, %s26
    %s43 = sphi 0, %s27
    %s47 = sphi 0, %s47
    %s49 = sphi 0, %s47
    %s50 = sphi 0, %s49
    %s64 = sphi 0, %s50
    %s68 = sphi 0, %s68
    %s70 = sphi 0, %s68
    %s71 = sphi 0, %s70
    %s85 = sphi 0, %s71
    %s89 = sphi 0, %s89
    %s91 = sphi 0, %s89
    %s92 = sphi 0, %s91
    %s106 = sphi 0, %s92
    %s110 = sphi 0, %s110
    %s112 = sphi 0, %s110
    %s113 = sphi 0, %s112
    %s127 = sphi 0, %s113
    %s133 = sphi 0, %s135
    %s136 = sphi 0, %s133
    %s137 = sphi 0, %s136
    %s153 = sphi 0, %s137
  $region4: #{net_forward.1} parent=0 // loop_header_branch
    %16 = sbr.rel (%p14) target = $region8
  $region5: #{net_forward.1} parent=0 // loop_body
    %s18 = ssub.s32 %s13, 1
    %s19 = ssub.s32 %s13, 2
    %s20 = sadd.s32 %s13, 1
    %s21 = ssub.s32 %s13, %s20
    %p22 = scmp.eq.s32.totalorder %s21, 0
    %s24 = sadd.s32 %s23, 1
    %s25 = scalar_select %p22, %s23, %s24
    %p28 = pneg %p22
    %p29 = scmp.eq.s32.totalorder %s13, 1
    %p30 = por %p28, %p29
    %p31 = scmp.ne.s32.totalorder %s23, %s26
    %p32 = scmp.eq.s32.totalorder %s13, 0
    %p33 = por %p31, %p32
    %p34 = scmp.ne.s32.totalorder %s23, %s26
    %p35 = scmp.eq.s32.totalorder %s18, 1
    %p36 = por %p34, %p35
    %p37 = scmp.ne.s32.totalorder %s26, %s27
    %p38 = scmp.eq.s32.totalorder %s18, 0
    %p39 = por %p37, %p38
    %p40 = scmp.ne.s32.totalorder %s26, %s27
    %p41 = scmp.eq.s32.totalorder %s19, 1
    %p42 = por %p40, %p41
    %p44 = scmp.ne.s32.totalorder %s27, %s43
    %p45 = scmp.eq.s32.totalorder %s19, 0
    %p46 = por %p44, %p45
    %s48 = sadd.s32 %s47, 1
    %p51 = scmp.eq.s32.totalorder %s13, 1
    %p52 = scmp.ne.s32.totalorder %s47, %s49
    %p53 = scmp.eq.s32.totalorder %s13, 0
    %p54 = por %p52, %p53
    %p55 = scmp.ne.s32.totalorder %s47, %s49
    %p56 = scmp.eq.s32.totalorder %s18, 1
    %p57 = por %p55, %p56
    %p58 = scmp.ne.s32.totalorder %s49, %s50
    %p59 = scmp.eq.s32.totalorder %s18, 0
    %p60 = por %p58, %p59
    %p61 = scmp.ne.s32.totalorder %s49, %s50
    %p62 = scmp.eq.s32.totalorder %s19, 1
    %p63 = por %p61, %p62
    %p65 = scmp.ne.s32.totalorder %s50, %s64
    %p66 = scmp.eq.s32.totalorder %s19, 0
    %p67 = por %p65, %p66
    %s69 = sadd.s32 %s68, 1
    %p72 = scmp.eq.s32.totalorder %s13, 1
    %p73 = scmp.ne.s32.totalorder %s68, %s70
    %p74 = scmp.eq.s32.totalorder %s13, 0
    %p75 = por %p73, %p74
    %p76 = scmp.ne.s32.totalorder %s68, %s70
    %p77 = scmp.eq.s32.totalorder %s18, 1
    %p78 = por %p76, %p77
    %p79 = scmp.ne.s32.totalorder %s70, %s71
    %p80 = scmp.eq.s32.totalorder %s18, 0
    %p81 = por %p79, %p80
    %p82 = scmp.ne.s32.totalorder %s70, %s71
    %p83 = scmp.eq.s32.totalorder %s19, 1
    %p84 = por %p82, %p83
    %p86 = scmp.ne.s32.totalorder %s71, %s85
    %p87 = scmp.eq.s32.totalorder %s19, 0
    %p88 = por %p86, %p87
    %s90 = sadd.s32 %s89, 1
    %p93 = scmp.eq.s32.totalorder %s13, 1
    %p94 = scmp.ne.s32.totalorder %s89, %s91
    %p95 = scmp.eq.s32.totalorder %s13, 0
    %p96 = por %p94, %p95
    %p97 = scmp.ne.s32.totalorder %s89, %s91
    %p98 = scmp.eq.s32.totalorder %s18, 1
    %p99 = por %p97, %p98
    %p100 = scmp.ne.s32.totalorder %s91, %s92
    %p101 = scmp.eq.s32.totalorder %s18, 0
    %p102 = por %p100, %p101
    %p103 = scmp.ne.s32.totalorder %s91, %s92
    %p104 = scmp.eq.s32.totalorder %s19, 1
    %p105 = por %p103, %p104
    %p107 = scmp.ne.s32.totalorder %s92, %s106
    %p108 = scmp.eq.s32.totalorder %s19, 0
    %p109 = por %p107, %p108
    %s111 = sadd.s32 %s110, 1
    %p114 = scmp.eq.s32.totalorder %s13, 1
    %p115 = scmp.ne.s32.totalorder %s110, %s112
    %p116 = scmp.eq.s32.totalorder %s13, 0
    %p117 = por %p115, %p116
    %p118 = scmp.ne.s32.totalorder %s110, %s112
    %p119 = scmp.eq.s32.totalorder %s18, 1
    %p120 = por %p118, %p119
    %p121 = scmp.ne.s32.totalorder %s112, %s113
    %p122 = scmp.eq.s32.totalorder %s18, 0
    %p123 = por %p121, %p122
    %p124 = scmp.ne.s32.totalorder %s112, %s113
    %p125 = scmp.eq.s32.totalorder %s19, 1
    %p126 = por %p124, %p125
    %p128 = scmp.ne.s32.totalorder %s113, %s127
    %p129 = scmp.eq.s32.totalorder %s19, 0
    %p130 = por %p128, %p129
    %s131 = ssub.s32 %s13, %s20
    %p132 = scmp.eq.s32.totalorder %s131, 0
    %s134 = sadd.s32 %s133, 1
    %s135 = scalar_select %p132, %s133, %s134
    %p138 = pneg %p132
    %p139 = scmp.eq.s32.totalorder %s13, 1
    %p140 = por %p138, %p139
    %p141 = scmp.ne.s32.totalorder %s133, %s136
    %p142 = scmp.eq.s32.totalorder %s13, 0
    %p143 = por %p141, %p142
    %p144 = scmp.ne.s32.totalorder %s133, %s136
    %p145 = scmp.eq.s32.totalorder %s18, 1
    %p146 = por %p144, %p145
    %p147 = scmp.ne.s32.totalorder %s136, %s137
    %p148 = scmp.eq.s32.totalorder %s18, 0
    %p149 = por %p147, %p148
    %p150 = scmp.ne.s32.totalorder %s136, %s137
    %p151 = scmp.eq.s32.totalorder %s19, 1
    %p152 = por %p150, %p151
    %p154 = scmp.ne.s32.totalorder %s137, %s153
    %p155 = scmp.eq.s32.totalorder %s19, 0
    %p156 = por %p154, %p155
    %p157 = scmp.le.s32.totalorder 1, %s13
    %p158 = scmp.lt.s32.totalorder %s13, 3
    %p159 = pnand %p157, %p158
    %p160 = pneg %p159
    // Predicated region
    $region9: #{net_forward.1} parent=5 // pred_check
      _
    $region10: #{net_forward.1} parent=5 // pred_check_branch
      %162 = sbr.rel (%p159) target = $region12
    $region11: #{net_forward.1} parent=5 // pred_region
      %s163 = ssub.s32 %s13, 1
      // Predicated region
      $region13: #{net_forward.1} parent=11 // pred_check
        %p164 = pneg %p60
      $region14: #{net_forward.1} parent=11 // pred_check_branch
        %166 = sbr.rel (%p164) target = $region16
      $region15: #{net_forward.1} parent=11 // pred_region
        _
      $region16: #{net_forward.1} parent=11 // pred_fallthru
        _
      // Predicated region
      $region17: #{net_forward.1} parent=11 // pred_check
        %p167 = pneg %p81
      $region18: #{net_forward.1} parent=11 // pred_check_branch
        %169 = sbr.rel (%p167) target = $region20
      $region19: #{net_forward.1} parent=11 // pred_region
        _
      $region20: #{net_forward.1} parent=11 // pred_fallthru
        _
      // Predicated region
      $region21: #{net_forward.1} parent=11 // pred_check
        %p170 = pneg %p102
      $region22: #{net_forward.1} parent=11 // pred_check_branch
        %172 = sbr.rel (%p170) target = $region24
      $region23: #{net_forward.1} parent=11 // pred_region
        _
      $region24: #{net_forward.1} parent=11 // pred_fallthru
        _
      // Predicated region
      $region25: #{net_forward.1} parent=11 // pred_check
        %p173 = pneg %p123
      $region26: #{net_forward.1} parent=11 // pred_check_branch
        %175 = sbr.rel (%p173) target = $region28
      $region27: #{net_forward.1} parent=11 // pred_region
        _
      $region28: #{net_forward.1} parent=11 // pred_fallthru
        _
    $region12: #{net_forward.1} parent=5 // pred_fallthru
      _
    %p176 = scmp.lt.s32.totalorder %s13, 2
    // Predicated region
    $region29: #{net_forward.1} parent=5 // pred_check
      %p177 = pneg %p176
    $region30: #{net_forward.1} parent=5 // pred_check_branch
      %179 = sbr.rel (%p177) target = $region32
    $region31: #{net_forward.1} parent=5 // pred_region
      // Predicated region
      $region33: #{net_forward.1} parent=31 // pred_check
        %p180 = pneg %p33
      $region34: #{net_forward.1} parent=31 // pred_check_branch
        %182 = sbr.rel (%p180) target = $region36
      $region35: #{net_forward.1} parent=31 // pred_region
        %p183 = scmp.lt.s32.totalorder %s13, 1
        %s184 = scalar_select %p183, %s13, 1
        %s185 = smul.addr %s184, 8
        %s186 = scalar_lea.vmem %s0, %s185
      $region36: #{net_forward.1} parent=31 // pred_fallthru
        _
    $region32: #{net_forward.1} parent=5 // pred_fallthru
      _
    %p187 = scmp.le.s32.totalorder 1, %s13
    %p188 = scmp.lt.s32.totalorder %s13, 3
    %p189 = pnand %p187, %p188
    %p190 = pneg %p189
    // Predicated region
    $region37: #{net_forward.1} parent=5 // pred_check
      _
    $region38: #{net_forward.1} parent=5 // pred_check_branch
      %192 = sbr.rel (%p189) target = $region40
    $region39: #{net_forward.1} parent=5 // pred_region
      %s193 = ssub.s32 %s13, 1
      %p194 = scmp.lt.s32.totalorder %s18, 1
      %s195 = scalar_select %p194, %s18, 1
      %s196 = smul.addr %s195, 8
      %s197 = scalar_lea.vmem %s0, %s196
      %p198 = pneg %p39
      %p199 = pneg %p36
      %p200 = pneg %p60
      %p201 = pneg %p57
      %p202 = pneg %p81
      %p203 = pneg %p78
      %p204 = pneg %p102
      %p205 = pneg %p99
      %p206 = pneg %p123
      %p207 = pneg %p120
      %p208 = pneg %p149
      %p209 = pneg %p146
      %p210 = scmp.lt.s32.totalorder %s18, 1
      %s211 = scalar_select %p210, %s18, 1
      %s212 = smul.addr %s211, 8
      %s213 = scalar_lea.vmem %s5, %s212
      %p214 = scmp.lt.s32.totalorder %s18, 1
      %s215 = scalar_select %p214, %s18, 1
      %s216 = smul.addr %s215, 8
      %s217 = scalar_lea.vmem %s0, %s216
      %p218 = scmp.lt.s32.totalorder %s18, 1
      %s219 = scalar_select %p218, %s18, 1
      %s220 = smul.addr %s219, 8
      %s221 = scalar_lea.vmem %s5, %s220
      %v222 = vld [vmem:[%s217] sm:$0xff]
      %v223 = vld [vmem:[%s1] sm:$0xf]
      %v224 = vld [vmem:[%s2] sm:$0x1]
      %v226 = vlaneseq
      %v227 = vshrl.u32 %v226, 7
      %v228 = vsub.s32 0, %v227
      %v229 = vrot.slane %v224, %v228
      %vm231 = vcmask 31744
      %v233 = vsel %vm231, %v222, 0
      %vm235 = vcmask 1043456
      %v237 = vsel %vm235, %v223, 0
      %239 = vmatprep.subr.mxu0 0.0
      %240 = vmatpush1.msra.mxu0 %v237
      %241 = vmatprep.subr.mxu0 0.0
      %242 = vmatpush1.msra.mxu0 0.0
      %243 = vmatprep.subr.mxu0 0.0
      %244 = vmatpush1.msra.mxu0 0.0
      %245 = vmatprep.subr.mxu0 0.0
      %246 = vmatpush1.msra.mxu0 0.0
      %247 = vmatprep.subr.mxu0 0.0
      %248 = vmatpush1.msra.mxu0 0.0
      %249 = vmatprep.subr.mxu0 0.0
      %250 = vmatpush1.msra.mxu0 0.0
      %251 = vmatprep.subr.mxu0 0.0
      %252 = vmatpush1.msra.mxu0 0.0
      %253 = vmatprep.subr.mxu0 0.0
      %254 = vmatpush1.msra.mxu0 0.0
      %255 = vmatprep.subr.mxu0 0.0
      %256 = vmatpush1.msra.mxu0 0.0
      %257 = vmatprep.subr.mxu0 0.0
      %258 = vmatpush1.msra.mxu0 0.0
      %259 = vmatprep.subr.mxu0 0.0
      %260 = vmatpush1.msra.mxu0 0.0
      %261 = vmatprep.subr.mxu0 0.0
      %262 = vmatpush1.msra.mxu0 0.0
      %263 = vmatprep.subr.mxu0 0.0
      %264 = vmatpush1.msra.mxu0 0.0
      %265 = vmatprep.subr.mxu0 0.0
      %266 = vmatpush1.msra.mxu0 0.0
      %267 = vmatprep.subr.mxu0 0.0
      %268 = vmatpush1.msra.mxu0 0.0
      %269 = vmatprep.subr.mxu0 0.0
      %270 = vmatpush1.msra.mxu0 0.0
      %271 = vmatprep.subr.mxu0 0.0
      %272 = vmatpush1.msra.mxu0 0.0
      %273 = vmatprep.subr.mxu0 0.0
      %274 = vmatpush1.msra.mxu0 0.0
      %275 = vmatprep.subr.mxu0 0.0
      %276 = vmatpush1.msra.mxu0 0.0
      %277 = vmatprep.subr.mxu0 0.0
      %278 = vmatpush1.msra.mxu0 0.0
      %279 = vmatprep.subr.mxu0 0.0
      %280 = vmatpush1.msra.mxu0 0.0
      %281 = vmatprep.subr.mxu0 0.0
      %282 = vmatpush1.msra.mxu0 0.0
      %283 = vmatprep.subr.mxu0 0.0
      %284 = vmatpush1.msra.mxu0 0.0
      %285 = vmatprep.subr.mxu0 0.0
      %286 = vmatpush1.msra.mxu0 0.0
      %287 = vmatprep.subr.mxu0 0.0
      %288 = vmatpush1.msra.mxu0 0.0
      %289 = vmatprep.subr.mxu0 0.0
      %290 = vmatpush1.msra.mxu0 0.0
      %291 = vmatprep.subr.mxu0 0.0
      %292 = vmatpush1.msra.mxu0 0.0
      %293 = vmatprep.subr.mxu0 0.0
      %294 = vmatpush1.msra.mxu0 0.0
      %295 = vmatprep.subr.mxu0 0.0
      %296 = vmatpush1.msra.mxu0 0.0
      %297 = vmatprep.subr.mxu0 0.0
      %298 = vmatpush1.msra.mxu0 0.0
      %299 = vmatprep.subr.mxu0 0.0
      %300 = vmatpush1.msra.mxu0 0.0
      %301 = vmatprep.subr.mxu0 0.0
      %302 = vmatpush1.msra.mxu0 0.0
      %303 = vmatprep.mubr.f32.mxu0 0.0
      %304 = vmatmul.mubr.f32.gmra.mrb[0].mxu0 %v233
      %v305 = vpop.f32.mrb[0].mxu0
      %v306 = vadd.f32 %v229, %v305
      %v307 = vpop.f32.mrb[0].mxu0
      %308 = vdwg.mxu0
      %v309 = vmax.f32 %v306, 0.0
      %v310 = vld [vmem:[%s3] sm:$0xff]
      %v311 = vld [vmem:[%s3 + $0x8] sm:$0xff]
      %v312 = vld [vmem:[%s3 + $0x10] sm:$0xff]
      %v313 = vld [vmem:[%s3 + $0x18] sm:$0xff]
      %v314 = vld [vmem:[#allocation2] sm:$0x1]
      %v316 = vlaneseq
      %v317 = vshrl.u32 %v316, 7
      %v318 = vsub.s32 0, %v317
      %v319 = vrot.slane %v314, %v318
      %vm321 = vcmask 261120
      %v323 = vsel %vm321, %v309, 0
      %325 = vmatprep.subr.mxu0 0.0
      %326 = vmatpush1.msra.mxu0 %v310
      %327 = vmatprep.subr.mxu0 0.0
      %328 = vmatpush1.msra.mxu0 %v311
      %329 = vmatprep.subr.mxu0 0.0
      %330 = vmatpush1.msra.mxu0 %v312
      %331 = vmatprep.subr.mxu0 0.0
      %332 = vmatpush1.msra.mxu0 %v313
      %333 = vmatprep.subr.mxu0 0.0
      %334 = vmatpush1.msra.mxu0 0.0
      %335 = vmatprep.subr.mxu0 0.0
      %336 = vmatpush1.msra.mxu0 0.0
      %337 = vmatprep.subr.mxu0 0.0
      %338 = vmatpush1.msra.mxu0 0.0
      %339 = vmatprep.subr.mxu0 0.0
      %340 = vmatpush1.msra.mxu0 0.0
      %341 = vmatprep.subr.mxu0 0.0
      %342 = vmatpush1.msra.mxu0 0.0
      %343 = vmatprep.subr.mxu0 0.0
      %344 = vmatpush1.msra.mxu0 0.0
      %345 = vmatprep.subr.mxu0 0.0
      %346 = vmatpush1.msra.mxu0 0.0
      %347 = vmatprep.subr.mxu0 0.0
      %348 = vmatpush1.msra.mxu0 0.0
      %349 = vmatprep.subr.mxu0 0.0
      %350 = vmatpush1.msra.mxu0 0.0
      %351 = vmatprep.subr.mxu0 0.0
      %352 = vmatpush1.msra.mxu0 0.0
      %353 = vmatprep.subr.mxu0 0.0
      %354 = vmatpush1.msra.mxu0 0.0
      %355 = vmatprep.subr.mxu0 0.0
      %356 = vmatpush1.msra.mxu0 0.0
      %357 = vmatprep.subr.mxu0 0.0
      %358 = vmatpush1.msra.mxu0 0.0
      %359 = vmatprep.subr.mxu0 0.0
      %360 = vmatpush1.msra.mxu0 0.0
      %361 = vmatprep.subr.mxu0 0.0
      %362 = vmatpush1.msra.mxu0 0.0
      %363 = vmatprep.subr.mxu0 0.0
      %364 = vmatpush1.msra.mxu0 0.0
      %365 = vmatprep.subr.mxu0 0.0
      %366 = vmatpush1.msra.mxu0 0.0
      %367 = vmatprep.subr.mxu0 0.0
      %368 = vmatpush1.msra.mxu0 0.0
      %369 = vmatprep.subr.mxu0 0.0
      %370 = vmatpush1.msra.mxu0 0.0
      %371 = vmatprep.subr.mxu0 0.0
      %372 = vmatpush1.msra.mxu0 0.0
      %373 = vmatprep.subr.mxu0 0.0
      %374 = vmatpush1.msra.mxu0 0.0
      %375 = vmatprep.subr.mxu0 0.0
      %376 = vmatpush1.msra.mxu0 0.0
      %377 = vmatprep.subr.mxu0 0.0
      %378 = vmatpush1.msra.mxu0 0.0
      %379 = vmatprep.subr.mxu0 0.0
      %380 = vmatpush1.msra.mxu0 0.0
      %381 = vmatprep.subr.mxu0 0.0
      %382 = vmatpush1.msra.mxu0 0.0
      %383 = vmatprep.subr.mxu0 0.0
      %384 = vmatpush1.msra.mxu0 0.0
      %385 = vmatprep.subr.mxu0 0.0
      %386 = vmatpush1.msra.mxu0 0.0
      %387 = vmatprep.subr.mxu0 0.0
      %388 = vmatpush1.msra.mxu0 0.0
      %389 = vmatprep.mubr.f32.mxu0 0.0
      %390 = vmatmul.mubr.f32.gmra.mrb[0].mxu0 %v323
      %v391 = vpop.f32.mrb[0].mxu0
      %v392 = vadd.f32 %v319, %v391
      %v393 = vpop.f32.mrb[0].mxu0
      %394 = vdwg.mxu0
      %vm395 = vcmask 7168
      %396 = vst.msk [vmem:[%s221] sm:$0xff] %vm395, %v392
      %p397 = scmp.lt.s32.totalorder %s18, 1
      %s398 = scalar_select %p397, %s18, 1
      %s399 = smul.addr %s398, 8
      %s400 = scalar_lea.vmem %s5, %s399
      // Predicated region
      $region41: #{net_forward.1} parent=39 // pred_check
        %p401 = pneg %p146
      $region42: #{net_forward.1} parent=39 // pred_check_branch
        %403 = sbr.rel (%p401) target = $region44
      $region43: #{net_forward.1} parent=39 // pred_region
        _
      $region44: #{net_forward.1} parent=39 // pred_fallthru
        _
    $region40: #{net_forward.1} parent=5 // pred_fallthru
      _
    %p404 = scmp.le.s32.totalorder 2, %s13
    // Predicated region
    $region45: #{net_forward.1} parent=5 // pred_check
      %p405 = pneg %p404
    $region46: #{net_forward.1} parent=5 // pred_check_branch
      %407 = sbr.rel (%p405) target = $region48
    $region47: #{net_forward.1} parent=5 // pred_region
      %s408 = ssub.s32 %s13, 2
      // Predicated region
      $region49: #{net_forward.1} parent=47 // pred_check
        %p409 = pneg %p152
      $region50: #{net_forward.1} parent=47 // pred_check_branch
        %411 = sbr.rel (%p409) target = $region52
      $region51: #{net_forward.1} parent=47 // pred_region
        %p412 = scmp.lt.s32.totalorder %s19, 1
        %s413 = scalar_select %p412, %s19, 1
        %s414 = smul.addr %s413, 8
        %s415 = scalar_lea.vmem %s5, %s414
      $region52: #{net_forward.1} parent=47 // pred_fallthru
        _
    $region48: #{net_forward.1} parent=5 // pred_fallthru
      _
  $region6: #{net_forward.1} parent=0 // loop_footer
    %s17 = sadd.s32 1, %s13
  $region7: #{net_forward.1} parent=0 // loop_footer_branch
    %12 = sbr.rel target = $region3
  $region8: #{net_forward.1} parent=0 // loop_exit
    _

</llo_original>
